<compile_context>
chip_gen: v5e
topology: v5e:2x2
jax: 0.10.0
libtpu: 0.0.40
codegen_flags: <defaults>
</compile_context>

<pallas_src>
import jax
import jax.numpy as jnp
from jax.experimental import pallas as pl
from jax.experimental.pallas import tpu as pltpu


# ----------------------------------------------------------------------------
# Fused kernel.
#   x_ref    : (C*B, Hin*Win)    raw image_01, channel-major rows (c*B + b)
#   p2_ref   : (Hin*Win, HWout)  2 * area-pooling operator (norm scale folded)
#   w1_ref   : (C, HWout, H)     first-layer weight, split into channel blocks
#   b1_ref   : (1, H)            b1 - colsum(w1)   (norm shift folded)
#   w2_ref   : (H, D)
#   b2_ref   : (1, D)
#   lavg_ref : (1, D)            latent_avg flattened
#   o_ref    : (B, D)            codes + latent_avg, flattened (lane-dense)
# ----------------------------------------------------------------------------
def _encoder_fused_kernel(x_ref, p2_ref, w1_ref, b1_ref, w2_ref, b2_ref,
                          lavg_ref, o_ref):
    C, HWout, H = w1_ref.shape
    B = o_ref.shape[0]

    # normalization + area downsample as ONE lane-dense MXU contraction
    pooled = jnp.dot(x_ref[...], p2_ref[...],
                     preferred_element_type=jnp.float32)      # (C*B, HWout)

    # head layer 1: contraction over (channel, pooled-pixel) = K split into
    # C contiguous blocks of HWout (same MXU work as one K=C*HWout matmul).
    h = jnp.zeros((B, H), dtype=jnp.float32)
    for c in range(C):                                        # small static loop
        h = h + jnp.dot(pooled[c * B:(c + 1) * B, :], w1_ref[c],
                        preferred_element_type=jnp.float32)   # (B, H)
    h = jnp.maximum(h + b1_ref[...], 0.0)

    # head layer 2 + latent_avg (w+ branch)
    y = jnp.dot(h, w2_ref[...], preferred_element_type=jnp.float32) + b2_ref[...]
    o_ref[...] = y + lavg_ref[...]


def encoder_forward(image_01, params, img_size):
    B, C, Hin, Win = image_01.shape
    Hout = Wout = img_size
    # area interpolation == average pooling only for integer downsample factors
    assert Hin % Hout == 0 and Win % Wout == 0 and Hin >= Hout and Win >= Wout, (
        "encoder_forward requires Hin/Win to be integer multiples of img_size")
    fh, fw = Hin // Hout, Win // Wout
    HWin, HWout = Hin * Win, Hout * Wout

    w1, b1, w2, b2 = params["w1"], params["b1"], params["w2"], params["b2"]
    latent_avg = params["latent_avg"]
    n_styles, latent_dim = latent_avg.shape
    D = n_styles * latent_dim
    H_ = w1.shape[1]

    # --- one-time operator / weight preparation (wrapper side) ---------------
    # row / column average-pooling operators
    rh = jnp.repeat(jnp.eye(Hout, dtype=jnp.float32), fh, axis=0) / fh   # (Hin, Hout)
    rw = jnp.repeat(jnp.eye(Wout, dtype=jnp.float32), fw, axis=0) / fw   # (Win, Wout)
    # combined flattened-spatial pooling operator with (x-0.5)/0.5 scale folded
    p2 = 2.0 * jnp.kron(rh, rw)                                          # (HWin, HWout)
    # fold the "-1" shift (pooling columns sum to 1, so it is constant) into b1
    b1_adj = b1 - jnp.sum(w1, axis=0, keepdims=True)                     # (1, H_)
    w1_blk = w1.reshape(C, HWout, H_)                                    # channel blocks
    lavg_flat = latent_avg.reshape(1, D)

    # layout plumbing: channel-major rows so each channel's pooled block is a
    # contiguous sublane slice inside the kernel (tiny transpose, XLA side).
    x_cm = image_01.transpose(1, 0, 2, 3).reshape(C * B, HWin)

    codes_flat = pl.pallas_call(
        _encoder_fused_kernel,
        out_shape=jax.ShapeDtypeStruct((B, D), jnp.float32),
        grid=(1,),                                   # whole batch in one step
        in_specs=[
            pl.BlockSpec((C * B, HWin), lambda i: (0, 0)),
            pl.BlockSpec((HWin, HWout), lambda i: (0, 0)),
            pl.BlockSpec((C, HWout, H_), lambda i: (0, 0, 0)),
            pl.BlockSpec((1, H_), lambda i: (0, 0)),
            pl.BlockSpec((H_, D), lambda i: (0, 0)),
            pl.BlockSpec((1, D), lambda i: (0, 0)),
            pl.BlockSpec((1, D), lambda i: (0, 0)),
        ],
        out_specs=pl.BlockSpec((B, D), lambda i: (0, 0)),
        compiler_params=pltpu.CompilerParams(
            dimension_semantics=("arbitrary",)),     # single TC, no core split
    )(x_cm, p2, w1_blk, b1_adj, w2, b2, lavg_flat)

    return codes_flat.reshape(B, n_styles, latent_dim)


def _reference_forward(image_01, params, img_size):
    B, C, Hin, Win = image_01.shape
    x = (image_01 - 0.5) / 0.5
    if Hin != img_size or Win != img_size:
        fh, fw = Hin // img_size, Win // img_size
        x = x.reshape(B, C, img_size, fh, img_size, fw).mean(axis=(3, 5))
    flat = x.reshape(B, -1)
    h = jnp.maximum(flat @ params["w1"] + params["b1"], 0.0)
    y = h @ params["w2"] + params["b2"]
    n_styles, latent_dim = params["latent_avg"].shape
    return y.reshape(B, n_styles, latent_dim) + params["latent_avg"][None]


if __name__ == "__main__":
    # small shapes consistent with the module's forward:
    #   image_01 in [0,1], NCHW, 3 channels, spatial 32 -> area-downsampled to 16
    B, C, S = 2, 3, 32
    IMG_SIZE = 16
    N_STYLES, LATENT_DIM = 4, 32            # D = 128 (lane-dense)
    HIDDEN = 128                            # multiple of 128 (per perf review)
    F_ = C * IMG_SIZE * IMG_SIZE            # 768 = 6 * 128

    key = jax.random.PRNGKey(0)
    k_img, k_w1, k_b1, k_w2, k_b2, k_avg = jax.random.split(key, 6)

    image_01 = jax.random.uniform(k_img, (B, C, S, S), dtype=jnp.float32)

    params = {
        "w1": jax.random.normal(k_w1, (F_, HIDDEN), dtype=jnp.float32) * 0.05,
        "b1": jax.random.normal(k_b1, (1, HIDDEN), dtype=jnp.float32) * 0.01,
        "w2": jax.random.normal(k_w2, (HIDDEN, N_STYLES * LATENT_DIM),
                                dtype=jnp.float32) * 0.05,
        "b2": jax.random.normal(k_b2, (1, N_STYLES * LATENT_DIM),
                                dtype=jnp.float32) * 0.01,
        "latent_avg": jax.random.normal(k_avg, (N_STYLES, LATENT_DIM),
                                        dtype=jnp.float32) * 0.1,
    }

    codes = encoder_forward(image_01, params, IMG_SIZE)
    codes = jax.block_until_ready(codes)

    ref = _reference_forward(image_01, params, IMG_SIZE)
    assert codes.shape == (B, N_STYLES, LATENT_DIM), codes.shape
    err = float(jnp.max(jnp.abs(codes - ref)))
    assert jnp.allclose(codes, ref, atol=1e-4, rtol=1e-4), err

    print("KERNEL_OK")
</pallas_src>

<mosaic_0001>
module attributes {stable_mosaic.version = 11 : i64} {
  func.func @_encoder_fused_kernel(%arg0: i32, %arg1: memref<6x1024xf32, #tpu.memory_space<vmem>>, %arg2: memref<1024x256xf32, #tpu.memory_space<vmem>>, %arg3: memref<3x256x128xf32, #tpu.memory_space<vmem>>, %arg4: memref<1x128xf32, #tpu.memory_space<vmem>>, %arg5: memref<128x128xf32, #tpu.memory_space<vmem>>, %arg6: memref<1x128xf32, #tpu.memory_space<vmem>>, %arg7: memref<1x128xf32, #tpu.memory_space<vmem>>, %arg8: memref<2x128xf32, #tpu.memory_space<vmem>>) attributes {dimension_semantics = [#tpu.dimension_semantics<arbitrary>], iteration_bounds = array<i64: 1>, scalar_prefetch = 0 : i64, scratch_operands = 0 : i64, tpu.core_type = #tpu.core_type<tc>, window_params = [{pipeline_mode = #tpu.pipeline_mode<synchronous>, transform_indices = @transform_0, window_bounds = array<i64: 6, 1024>}, {pipeline_mode = #tpu.pipeline_mode<synchronous>, transform_indices = @transform_1, window_bounds = array<i64: 1024, 256>}, {pipeline_mode = #tpu.pipeline_mode<synchronous>, transform_indices = @transform_2, window_bounds = array<i64: 3, 256, 128>}, {pipeline_mode = #tpu.pipeline_mode<synchronous>, transform_indices = @transform_3, window_bounds = array<i64: 1, 128>}, {pipeline_mode = #tpu.pipeline_mode<synchronous>, transform_indices = @transform_4, window_bounds = array<i64: 128, 128>}, {pipeline_mode = #tpu.pipeline_mode<synchronous>, transform_indices = @transform_5, window_bounds = array<i64: 1, 128>}, {pipeline_mode = #tpu.pipeline_mode<synchronous>, transform_indices = @transform_6, window_bounds = array<i64: 1, 128>}, {pipeline_mode = #tpu.pipeline_mode<synchronous>, transform_indices = @transform_7, window_bounds = array<i64: 2, 128>}]} {
    %c0 = arith.constant 0 : index
    %c0_0 = arith.constant 0 : index
    %0 = vector.load %arg1[%c0, %c0_0] : memref<6x1024xf32, #tpu.memory_space<vmem>>, vector<6x1024xf32>
    %c0_1 = arith.constant 0 : index
    %c0_2 = arith.constant 0 : index
    %1 = vector.load %arg2[%c0_1, %c0_2] : memref<1024x256xf32, #tpu.memory_space<vmem>>, vector<1024x256xf32>
    %cst = arith.constant dense<0.000000e+00> : vector<6x256xf32>
    %2 = tpu.matmul %0, %1, %cst {dimension_numbers = #tpu.dot_dimension_numbers<[1], [0], [0], [1], [0, 0, 1, 1], [], []>} : vector<6x1024xf32>, vector<1024x256xf32>, vector<6x256xf32> -> vector<6x256xf32>
    %cst_3 = arith.constant 0.000000e+00 : f32
    %3 = vector.broadcast %cst_3 : f32 to vector<2x128xf32>
    %4 = vector.extract_strided_slice %2 {offsets = [0, 0], sizes = [2, 256], strides = [1, 1]} : vector<6x256xf32> to vector<2x256xf32>
    %c0_4 = arith.constant 0 : index
    %c0_5 = arith.constant 0 : index
    %c0_6 = arith.constant 0 : index
    %5 = vector.load %arg3[%c0_4, %c0_5, %c0_6] : memref<3x256x128xf32, #tpu.memory_space<vmem>>, vector<1x256x128xf32>
    %6 = vector.shape_cast %5 : vector<1x256x128xf32> to vector<256x128xf32>
    %cst_7 = arith.constant dense<0.000000e+00> : vector<2x128xf32>
    %7 = tpu.matmul %4, %6, %cst_7 {dimension_numbers = #tpu.dot_dimension_numbers<[1], [0], [0], [1], [0, 0, 1, 1], [], []>} : vector<2x256xf32>, vector<256x128xf32>, vector<2x128xf32> -> vector<2x128xf32>
    %8 = arith.addf %3, %7 : vector<2x128xf32>
    %9 = vector.extract_strided_slice %2 {offsets = [2, 0], sizes = [2, 256], strides = [1, 1]} : vector<6x256xf32> to vector<2x256xf32>
    %c1 = arith.constant 1 : index
    %c0_8 = arith.constant 0 : index
    %c0_9 = arith.constant 0 : index
    %10 = vector.load %arg3[%c1, %c0_8, %c0_9] : memref<3x256x128xf32, #tpu.memory_space<vmem>>, vector<1x256x128xf32>
    %11 = vector.shape_cast %10 : vector<1x256x128xf32> to vector<256x128xf32>
    %cst_10 = arith.constant dense<0.000000e+00> : vector<2x128xf32>
    %12 = tpu.matmul %9, %11, %cst_10 {dimension_numbers = #tpu.dot_dimension_numbers<[1], [0], [0], [1], [0, 0, 1, 1], [], []>} : vector<2x256xf32>, vector<256x128xf32>, vector<2x128xf32> -> vector<2x128xf32>
    %13 = arith.addf %8, %12 : vector<2x128xf32>
    %14 = vector.extract_strided_slice %2 {offsets = [4, 0], sizes = [2, 256], strides = [1, 1]} : vector<6x256xf32> to vector<2x256xf32>
    %c2 = arith.constant 2 : index
    %c0_11 = arith.constant 0 : index
    %c0_12 = arith.constant 0 : index
    %15 = vector.load %arg3[%c2, %c0_11, %c0_12] : memref<3x256x128xf32, #tpu.memory_space<vmem>>, vector<1x256x128xf32>
    %16 = vector.shape_cast %15 : vector<1x256x128xf32> to vector<256x128xf32>
    %cst_13 = arith.constant dense<0.000000e+00> : vector<2x128xf32>
    %17 = tpu.matmul %14, %16, %cst_13 {dimension_numbers = #tpu.dot_dimension_numbers<[1], [0], [0], [1], [0, 0, 1, 1], [], []>} : vector<2x256xf32>, vector<256x128xf32>, vector<2x128xf32> -> vector<2x128xf32>
    %18 = arith.addf %13, %17 : vector<2x128xf32>
    %c0_14 = arith.constant 0 : index
    %c0_15 = arith.constant 0 : index
    %19 = vector.load %arg4[%c0_14, %c0_15] : memref<1x128xf32, #tpu.memory_space<vmem>>, vector<1x128xf32>
    %20 = vector.broadcast %19 : vector<1x128xf32> to vector<2x128xf32>
    %21 = arith.addf %18, %20 : vector<2x128xf32>
    %cst_16 = arith.constant 0.000000e+00 : f32
    %22 = vector.broadcast %cst_16 : f32 to vector<2x128xf32>
    %23 = arith.maximumf %21, %22 : vector<2x128xf32>
    %c0_17 = arith.constant 0 : index
    %c0_18 = arith.constant 0 : index
    %24 = vector.load %arg5[%c0_17, %c0_18] : memref<128x128xf32, #tpu.memory_space<vmem>>, vector<128x128xf32>
    %cst_19 = arith.constant dense<0.000000e+00> : vector<2x128xf32>
    %25 = tpu.matmul %23, %24, %cst_19 {dimension_numbers = #tpu.dot_dimension_numbers<[1], [0], [0], [1], [0, 0, 1, 1], [], []>} : vector<2x128xf32>, vector<128x128xf32>, vector<2x128xf32> -> vector<2x128xf32>
    %c0_20 = arith.constant 0 : index
    %c0_21 = arith.constant 0 : index
    %26 = vector.load %arg6[%c0_20, %c0_21] : memref<1x128xf32, #tpu.memory_space<vmem>>, vector<1x128xf32>
    %27 = vector.broadcast %26 : vector<1x128xf32> to vector<2x128xf32>
    %28 = arith.addf %25, %27 : vector<2x128xf32>
    %c0_22 = arith.constant 0 : index
    %c0_23 = arith.constant 0 : index
    %29 = vector.load %arg7[%c0_22, %c0_23] : memref<1x128xf32, #tpu.memory_space<vmem>>, vector<1x128xf32>
    %30 = vector.broadcast %29 : vector<1x128xf32> to vector<2x128xf32>
    %31 = arith.addf %28, %30 : vector<2x128xf32>
    %c0_24 = arith.constant 0 : index
    %c0_25 = arith.constant 0 : index
    %32 = vector.load %arg8[%c0_24, %c0_25] : memref<2x128xf32, #tpu.memory_space<vmem>>, vector<2x128xf32>
    tpu.vector_store %arg8[%c0_24, %c0_25], %31 {strides = array<i32>} : memref<2x128xf32, #tpu.memory_space<vmem>>, vector<2x128xf32>,
    return
  }
  func.func @transform_0(%arg0: i32) -> (i32, i32) {
    %c0_i32 = arith.constant 0 : i32
    %c0_i32_0 = arith.constant 0 : i32
    %c0_i32_1 = arith.constant 0 : i32
    return %c0_i32, %c0_i32_0 : i32, i32
  }
  func.func @transform_1(%arg0: i32) -> (i32, i32) {
    %c0_i32 = arith.constant 0 : i32
    %c0_i32_0 = arith.constant 0 : i32
    %c0_i32_1 = arith.constant 0 : i32
    return %c0_i32, %c0_i32_0 : i32, i32
  }
  func.func @transform_2(%arg0: i32) -> (i32, i32, i32) {
    %c0_i32 = arith.constant 0 : i32
    %c0_i32_0 = arith.constant 0 : i32
    %c0_i32_1 = arith.constant 0 : i32
    %c0_i32_2 = arith.constant 0 : i32
    return %c0_i32, %c0_i32_0, %c0_i32_1 : i32, i32, i32
  }
  func.func @transform_3(%arg0: i32) -> (i32, i32) {
    %c0_i32 = arith.constant 0 : i32
    %c0_i32_0 = arith.constant 0 : i32
    %c0_i32_1 = arith.constant 0 : i32
    return %c0_i32, %c0_i32_0 : i32, i32
  }
  func.func @transform_4(%arg0: i32) -> (i32, i32) {
    %c0_i32 = arith.constant 0 : i32
    %c0_i32_0 = arith.constant 0 : i32
    %c0_i32_1 = arith.constant 0 : i32
    return %c0_i32, %c0_i32_0 : i32, i32
  }
  func.func @transform_5(%arg0: i32) -> (i32, i32) {
    %c0_i32 = arith.constant 0 : i32
    %c0_i32_0 = arith.constant 0 : i32
    %c0_i32_1 = arith.constant 0 : i32
    return %c0_i32, %c0_i32_0 : i32, i32
  }
  func.func @transform_6(%arg0: i32) -> (i32, i32) {
    %c0_i32 = arith.constant 0 : i32
    %c0_i32_0 = arith.constant 0 : i32
    %c0_i32_1 = arith.constant 0 : i32
    return %c0_i32, %c0_i32_0 : i32, i32
  }
  func.func @transform_7(%arg0: i32) -> (i32, i32) {
    %c0_i32 = arith.constant 0 : i32
    %c0_i32_0 = arith.constant 0 : i32
    %c0_i32_1 = arith.constant 0 : i32
    return %c0_i32, %c0_i32_0 : i32, i32
  }
}

</mosaic_0001>

<llo_original>
// kernel: tpu_custom_call.1
$region0: #{tpu_custom_call.1}
  #allocation0 [shape = 'u32[]', space=smem, size = 0x4, offset = 0x4, fixed_abs, tag = 'smem constant byte address 0x4 - core index']
  #allocation1 [shape = 'u32[72,128]{1,0:T(1,128)}', space=vmem, size = 0x9000, scoped, tag = 'internal scratch']
  %s0 = inlined_call_operand.hbm [shape: f32[6,1024], index: 0, kind: input, shape index: {}]
  %s1 = inlined_call_operand.hbm [shape: f32[1024,256], index: 1, kind: input, shape index: {}]
  %s2 = inlined_call_operand.hbm [shape: f32[3,256,128], index: 2, kind: input, shape index: {}]
  %s3 = inlined_call_operand.vmem [shape: f32[1,128], index: 3, kind: input, shape index: {}]
  %s4 = inlined_call_operand.hbm [shape: f32[128,128], index: 4, kind: input, shape index: {}]
  %s5 = inlined_call_operand.vmem [shape: f32[1,128], index: 5, kind: input, shape index: {}]
  %s6 = inlined_call_operand.vmem [shape: f32[1,128], index: 6, kind: input, shape index: {}]
  %s7 = inlined_call_operand.hbm [shape: f32[2,128], index: 7, kind: output, shape index: {}]
  %s8 = sld [smem:[#allocation0]]
  $region54: #{tpu_custom_call.1} parent=0
    _
  %s10 = ssub.s32 1, %s8
  %s11 = scalar_select 0, %s10, %s8
  $region1: #{tpu_custom_call.1} parent=0
    #allocation2 [shape = 'u8[32768]{0}', space=vmem, size = 0x8000, scoped, tag = 'input window, operand 0, single buffered']
    #allocation3 [shape = 's32[1]{0}', space=sflag, size = 0x4, scoped, tag = 'scoped memory for tpu_custom_call.1']
    #allocation4 [shape = 's32[1]{0}', space=sflag, size = 0x4, scoped, tag = 'scoped memory for tpu_custom_call.1']
    #allocation5 [shape = 'u8[1048576]{0}', space=vmem, size = 0x100000, scoped, tag = 'input window, operand 1, single buffered']
    #allocation6 [shape = 's32[1]{0}', space=sflag, size = 0x4, scoped, tag = 'scoped memory for tpu_custom_call.1']
    #allocation7 [shape = 'u8[393216]{0}', space=vmem, size = 0x60000, scoped, tag = 'input window, operand 2, single buffered']
    #allocation8 [shape = 'u8[65536]{0}', space=vmem, size = 0x10000, scoped, tag = 'input window, operand 4, single buffered']
    #allocation9 [shape = 's32[1]{0}', space=sflag, size = 0x4, scoped, tag = 'scoped memory for tpu_custom_call.1']
    #allocation10 [shape = 'u8[1024]{0}', space=vmem, size = 0x400, scoped, tag = 'output window, operand 0, single buffered']
    %12 = vsyncpa [#allocation3], 0
    %13 = vsyncpa [#allocation6], 0
    %14 = vsyncpa [#allocation9], 0
    %15 = vsyncpa [#allocation4], 0
    // Predicated region
    $region2: #{tpu_custom_call.1} parent=1 // pred_check
      _
    $region3: #{tpu_custom_call.1} parent=1 // pred_check_branch
      %17 = sbr.rel (0) target = $region5
    $region4: #{tpu_custom_call.1} parent=1 // pred_region
      %19 = vsyncadd [#allocation3], 0
      %s21 = sshll.u32 %s0, 4
      %s22 = int_to_ptr.hbm [resolvable:$true] %s21
      %s23 = sshll.u32 [#allocation2], 4
      %s24 = int_to_ptr.vmem [resolvable:$true] %s23
      %26 = dma.hbm_to_vmem [thread:$0]  %s22, 1024, %s24, [#allocation3]
    $region5: #{tpu_custom_call.1} parent=1 // pred_fallthru
      _
    // Predicated region
    $region6: #{tpu_custom_call.1} parent=1 // pred_check
      _
    $region7: #{tpu_custom_call.1} parent=1 // pred_check_branch
      %28 = sbr.rel (0) target = $region9
    $region8: #{tpu_custom_call.1} parent=1 // pred_region
      %30 = vsyncadd [#allocation6], 0
      %s31 = sshll.u32 %s1, 4
      %s32 = int_to_ptr.hbm [resolvable:$true] %s31
      %s33 = sshll.u32 [#allocation5], 4
      %s34 = int_to_ptr.vmem [resolvable:$true] %s33
      %39 = dma.hbm_to_vmem [thread:$0]  %s32, 32768, %s34, [#allocation6], 256, 256, 16
    $region9: #{tpu_custom_call.1} parent=1 // pred_fallthru
      _
    // Predicated region
    $region10: #{tpu_custom_call.1} parent=1 // pred_check
      _
    $region11: #{tpu_custom_call.1} parent=1 // pred_check_branch
      %41 = sbr.rel (0) target = $region13
    $region12: #{tpu_custom_call.1} parent=1 // pred_region
      %43 = vsyncadd [#allocation6], 0
      %s44 = sshll.u32 %s2, 4
      %s45 = int_to_ptr.hbm [resolvable:$true] %s44
      %s46 = sshll.u32 [#allocation7], 4
      %s47 = int_to_ptr.vmem [resolvable:$true] %s46
      %52 = dma.hbm_to_vmem [thread:$0]  %s45, 12288, %s47, [#allocation6], 128, 128, 8
    $region13: #{tpu_custom_call.1} parent=1 // pred_fallthru
      _
    // Predicated region
    $region14: #{tpu_custom_call.1} parent=1 // pred_check
      _
    $region15: #{tpu_custom_call.1} parent=1 // pred_check_branch
      %54 = sbr.rel (0) target = $region17
    $region16: #{tpu_custom_call.1} parent=1 // pred_region
      _
    $region17: #{tpu_custom_call.1} parent=1 // pred_fallthru
      _
    // Predicated region
    $region18: #{tpu_custom_call.1} parent=1 // pred_check
      _
    $region19: #{tpu_custom_call.1} parent=1 // pred_check_branch
      %56 = sbr.rel (0) target = $region21
    $region20: #{tpu_custom_call.1} parent=1 // pred_region
      %58 = vsyncadd [#allocation9], 0
      %s59 = sshll.u32 %s4, 4
      %s60 = int_to_ptr.hbm [resolvable:$true] %s59
      %s61 = sshll.u32 [#allocation8], 4
      %s62 = int_to_ptr.vmem [resolvable:$true] %s61
      %67 = dma.hbm_to_vmem [thread:$0]  %s60, 2048, %s62, [#allocation9], 128, 128, 8
    $region21: #{tpu_custom_call.1} parent=1 // pred_fallthru
      _
    // Predicated region
    $region22: #{tpu_custom_call.1} parent=1 // pred_check
      _
    $region23: #{tpu_custom_call.1} parent=1 // pred_check_branch
      %69 = sbr.rel (0) target = $region25
    $region24: #{tpu_custom_call.1} parent=1 // pred_region
      _
    $region25: #{tpu_custom_call.1} parent=1 // pred_fallthru
      _
    // Predicated region
    $region26: #{tpu_custom_call.1} parent=1 // pred_check
      _
    $region27: #{tpu_custom_call.1} parent=1 // pred_check_branch
      %71 = sbr.rel (0) target = $region29
    $region28: #{tpu_custom_call.1} parent=1 // pred_region
      _
    $region29: #{tpu_custom_call.1} parent=1 // pred_fallthru
      _
    // Predicated region
    $region30: #{tpu_custom_call.1} parent=1 // pred_check
      _
    $region31: #{tpu_custom_call.1} parent=1 // pred_check_branch
      %73 = sbr.rel (0) target = $region33
    $region32: #{tpu_custom_call.1} parent=1 // pred_region
      %75 = dma.done [#allocation3], 1024
    $region33: #{tpu_custom_call.1} parent=1 // pred_fallthru
      _
    // Predicated region
    $region34: #{tpu_custom_call.1} parent=1 // pred_check
      _
    $region35: #{tpu_custom_call.1} parent=1 // pred_check_branch
      %77 = sbr.rel (0) target = $region37
    $region36: #{tpu_custom_call.1} parent=1 // pred_region
      %79 = dma.done [#allocation6], 32768
    $region37: #{tpu_custom_call.1} parent=1 // pred_fallthru
      _
    // Predicated region
    $region38: #{tpu_custom_call.1} parent=1 // pred_check
      _
    $region39: #{tpu_custom_call.1} parent=1 // pred_check_branch
      %81 = sbr.rel (0) target = $region41
    $region40: #{tpu_custom_call.1} parent=1 // pred_region
      %83 = dma.done [#allocation6], 12288
    $region41: #{tpu_custom_call.1} parent=1 // pred_fallthru
      _
    // Predicated region
    $region42: #{tpu_custom_call.1} parent=1 // pred_check
      _
    $region43: #{tpu_custom_call.1} parent=1 // pred_check_branch
      %85 = sbr.rel (0) target = $region45
    $region44: #{tpu_custom_call.1} parent=1 // pred_region
      %87 = dma.done [#allocation9], 2048
    $region45: #{tpu_custom_call.1} parent=1 // pred_fallthru
      _
    %v88 = vld [vmem:[#allocation2] sm:$0x3f]
    %v89 = vld [vmem:[#allocation2 + $0x8] sm:$0x3f]
    %v90 = vld [vmem:[#allocation2 + $0x10] sm:$0x3f]
    %v91 = vld [vmem:[#allocation2 + $0x18] sm:$0x3f]
    %v92 = vld [vmem:[#allocation2 + $0x20] sm:$0x3f]
    %v93 = vld [vmem:[#allocation2 + $0x28] sm:$0x3f]
    %v94 = vld [vmem:[#allocation2 + $0x30] sm:$0x3f]
    %v95 = vld [vmem:[#allocation2 + $0x38] sm:$0x3f]
    %v96 = vld [vmem:[#allocation5] sm:$0xff]
    %v97 = vld [vmem:[#allocation5 + $0x8] sm:$0xff]
    %v98 = vld [vmem:[#allocation5 + $0x10] sm:$0xff]
    %v99 = vld [vmem:[#allocation5 + $0x18] sm:$0xff]
    %v100 = vld [vmem:[#allocation5 + $0x20] sm:$0xff]
    %v101 = vld [vmem:[#allocation5 + $0x28] sm:$0xff]
    %v102 = vld [vmem:[#allocation5 + $0x30] sm:$0xff]
    %v103 = vld [vmem:[#allocation5 + $0x38] sm:$0xff]
    %v104 = vld [vmem:[#allocation5 + $0x40] sm:$0xff]
    %v105 = vld [vmem:[#allocation5 + $0x48] sm:$0xff]
    %v106 = vld [vmem:[#allocation5 + $0x50] sm:$0xff]
    %v107 = vld [vmem:[#allocation5 + $0x58] sm:$0xff]
    %v108 = vld [vmem:[#allocation5 + $0x60] sm:$0xff]
    %v109 = vld [vmem:[#allocation5 + $0x68] sm:$0xff]
    %v110 = vld [vmem:[#allocation5 + $0x70] sm:$0xff]
    %v111 = vld [vmem:[#allocation5 + $0x78] sm:$0xff]
    %v112 = vld [vmem:[#allocation5 + $0x80] sm:$0xff]
    %v113 = vld [vmem:[#allocation5 + $0x88] sm:$0xff]
    %v114 = vld [vmem:[#allocation5 + $0x90] sm:$0xff]
    %v115 = vld [vmem:[#allocation5 + $0x98] sm:$0xff]
    %v116 = vld [vmem:[#allocation5 + $0xa0] sm:$0xff]
    %v117 = vld [vmem:[#allocation5 + $0xa8] sm:$0xff]
    %v118 = vld [vmem:[#allocation5 + $0xb0] sm:$0xff]
    %v119 = vld [vmem:[#allocation5 + $0xb8] sm:$0xff]
    %v120 = vld [vmem:[#allocation5 + $0xc0] sm:$0xff]
    %v121 = vld [vmem:[#allocation5 + $0xc8] sm:$0xff]
    %v122 = vld [vmem:[#allocation5 + $0xd0] sm:$0xff]
    %v123 = vld [vmem:[#allocation5 + $0xd8] sm:$0xff]
    %v124 = vld [vmem:[#allocation5 + $0xe0] sm:$0xff]
    %v125 = vld [vmem:[#allocation5 + $0xe8] sm:$0xff]
    %v126 = vld [vmem:[#allocation5 + $0xf0] sm:$0xff]
    %v127 = vld [vmem:[#allocation5 + $0xf8] sm:$0xff]
    %v128 = vld [vmem:[#allocation5 + $0x100] sm:$0xff]
    %v129 = vld [vmem:[#allocation5 + $0x108] sm:$0xff]
    %v130 = vld [vmem:[#allocation5 + $0x110] sm:$0xff]
    %v131 = vld [vmem:[#allocation5 + $0x118] sm:$0xff]
    %v132 = vld [vmem:[#allocation5 + $0x120] sm:$0xff]
    %v133 = vld [vmem:[#allocation5 + $0x128] sm:$0xff]
    %v134 = vld [vmem:[#allocation5 + $0x130] sm:$0xff]
    %v135 = vld [vmem:[#allocation5 + $0x138] sm:$0xff]
    %v136 = vld [vmem:[#allocation5 + $0x140] sm:$0xff]
    %v137 = vld [vmem:[#allocation5 + $0x148] sm:$0xff]
    %v138 = vld [vmem:[#allocation5 + $0x150] sm:$0xff]
    %v139 = vld [vmem:[#allocation5 + $0x158] sm:$0xff]
    %v140 = vld [vmem:[#allocation5 + $0x160] sm:$0xff]
    %v141 = vld [vmem:[#allocation5 + $0x168] sm:$0xff]
    %v142 = vld [vmem:[#allocation5 + $0x170] sm:$0xff]
    %v143 = vld [vmem:[#allocation5 + $0x178] sm:$0xff]
    %v144 = vld [vmem:[#allocation5 + $0x180] sm:$0xff]
    %v145 = vld [vmem:[#allocation5 + $0x188] sm:$0xff]
    %v146 = vld [vmem:[#allocation5 + $0x190] sm:$0xff]
    %v147 = vld [vmem:[#allocation5 + $0x198] sm:$0xff]
    %v148 = vld [vmem:[#allocation5 + $0x1a0] sm:$0xff]
    %v149 = vld [vmem:[#allocation5 + $0x1a8] sm:$0xff]
    %v150 = vld [vmem:[#allocation5 + $0x1b0] sm:$0xff]
    %v151 = vld [vmem:[#allocation5 + $0x1b8] sm:$0xff]
    %v152 = vld [vmem:[#allocation5 + $0x1c0] sm:$0xff]
    %v153 = vld [vmem:[#allocation5 + $0x1c8] sm:$0xff]
    %v154 = vld [vmem:[#allocation5 + $0x1d0] sm:$0xff]
    %v155 = vld [vmem:[#allocation5 + $0x1d8] sm:$0xff]
    %v156 = vld [vmem:[#allocation5 + $0x1e0] sm:$0xff]
    %v157 = vld [vmem:[#allocation5 + $0x1e8] sm:$0xff]
    %v158 = vld [vmem:[#allocation5 + $0x1f0] sm:$0xff]
    %v159 = vld [vmem:[#allocation5 + $0x1f8] sm:$0xff]
    %v160 = vld [vmem:[#allocation5 + $0x200] sm:$0xff]
    %v161 = vld [vmem:[#allocation5 + $0x208] sm:$0xff]
    %v162 = vld [vmem:[#allocation5 + $0x210] sm:$0xff]
    %v163 = vld [vmem:[#allocation5 + $0x218] sm:$0xff]
    %v164 = vld [vmem:[#allocation5 + $0x220] sm:$0xff]
    %v165 = vld [vmem:[#allocation5 + $0x228] sm:$0xff]
    %v166 = vld [vmem:[#allocation5 + $0x230] sm:$0xff]
    %v167 = vld [vmem:[#allocation5 + $0x238] sm:$0xff]
    %v168 = vld [vmem:[#allocation5 + $0x240] sm:$0xff]
    %v169 = vld [vmem:[#allocation5 + $0x248] sm:$0xff]
    %v170 = vld [vmem:[#allocation5 + $0x250] sm:$0xff]
    %v171 = vld [vmem:[#allocation5 + $0x258] sm:$0xff]
    %v172 = vld [vmem:[#allocation5 + $0x260] sm:$0xff]
    %v173 = vld [vmem:[#allocation5 + $0x268] sm:$0xff]
    %v174 = vld [vmem:[#allocation5 + $0x270] sm:$0xff]
    %v175 = vld [vmem:[#allocation5 + $0x278] sm:$0xff]
    %v176 = vld [vmem:[#allocation5 + $0x280] sm:$0xff]
    %v177 = vld [vmem:[#allocation5 + $0x288] sm:$0xff]
    %v178 = vld [vmem:[#allocation5 + $0x290] sm:$0xff]
    %v179 = vld [vmem:[#allocation5 + $0x298] sm:$0xff]
    %v180 = vld [vmem:[#allocation5 + $0x2a0] sm:$0xff]
    %v181 = vld [vmem:[#allocation5 + $0x2a8] sm:$0xff]
    %v182 = vld [vmem:[#allocation5 + $0x2b0] sm:$0xff]
    %v183 = vld [vmem:[#allocation5 + $0x2b8] sm:$0xff]
    %v184 = vld [vmem:[#allocation5 + $0x2c0] sm:$0xff]
    %v185 = vld [vmem:[#allocation5 + $0x2c8] sm:$0xff]
    %v186 = vld [vmem:[#allocation5 + $0x2d0] sm:$0xff]
    %v187 = vld [vmem:[#allocation5 + $0x2d8] sm:$0xff]
    %v188 = vld [vmem:[#allocation5 + $0x2e0] sm:$0xff]
    %v189 = vld [vmem:[#allocation5 + $0x2e8] sm:$0xff]
    %v190 = vld [vmem:[#allocation5 + $0x2f0] sm:$0xff]
    %v191 = vld [vmem:[#allocation5 + $0x2f8] sm:$0xff]
    %v192 = vld [vmem:[#allocation5 + $0x300] sm:$0xff]
    %v193 = vld [vmem:[#allocation5 + $0x308] sm:$0xff]
    %v194 = vld [vmem:[#allocation5 + $0x310] sm:$0xff]
    %v195 = vld [vmem:[#allocation5 + $0x318] sm:$0xff]
    %v196 = vld [vmem:[#allocation5 + $0x320] sm:$0xff]
    %v197 = vld [vmem:[#allocation5 + $0x328] sm:$0xff]
    %v198 = vld [vmem:[#allocation5 + $0x330] sm:$0xff]
    %v199 = vld [vmem:[#allocation5 + $0x338] sm:$0xff]
    %v200 = vld [vmem:[#allocation5 + $0x340] sm:$0xff]
    %v201 = vld [vmem:[#allocation5 + $0x348] sm:$0xff]
    %v202 = vld [vmem:[#allocation5 + $0x350] sm:$0xff]
    %v203 = vld [vmem:[#allocation5 + $0x358] sm:$0xff]
    %v204 = vld [vmem:[#allocation5 + $0x360] sm:$0xff]
    %v205 = vld [vmem:[#allocation5 + $0x368] sm:$0xff]
    %v206 = vld [vmem:[#allocation5 + $0x370] sm:$0xff]
    %v207 = vld [vmem:[#allocation5 + $0x378] sm:$0xff]
    %v208 = vld [vmem:[#allocation5 + $0x380] sm:$0xff]
    %v209 = vld [vmem:[#allocation5 + $0x388] sm:$0xff]
    %v210 = vld [vmem:[#allocation5 + $0x390] sm:$0xff]
    %v211 = vld [vmem:[#allocation5 + $0x398] sm:$0xff]
    %v212 = vld [vmem:[#allocation5 + $0x3a0] sm:$0xff]
    %v213 = vld [vmem:[#allocation5 + $0x3a8] sm:$0xff]
    %v214 = vld [vmem:[#allocation5 + $0x3b0] sm:$0xff]
    %v215 = vld [vmem:[#allocation5 + $0x3b8] sm:$0xff]
    %v216 = vld [vmem:[#allocation5 + $0x3c0] sm:$0xff]
    %v217 = vld [vmem:[#allocation5 + $0x3c8] sm:$0xff]
    %v218 = vld [vmem:[#allocation5 + $0x3d0] sm:$0xff]
    %v219 = vld [vmem:[#allocation5 + $0x3d8] sm:$0xff]
    %v220 = vld [vmem:[#allocation5 + $0x3e0] sm:$0xff]
    %v221 = vld [vmem:[#allocation5 + $0x3e8] sm:$0xff]
    %v222 = vld [vmem:[#allocation5 + $0x3f0] sm:$0xff]
    %v223 = vld [vmem:[#allocation5 + $0x3f8] sm:$0xff]
    %v224 = vld [vmem:[#allocation5 + $0x400] sm:$0xff]
    %v225 = vld [vmem:[#allocation5 + $0x408] sm:$0xff]
    %v226 = vld [vmem:[#allocation5 + $0x410] sm:$0xff]
    %v227 = vld [vmem:[#allocation5 + $0x418] sm:$0xff]
    %v228 = vld [vmem:[#allocation5 + $0x420] sm:$0xff]
    %v229 = vld [vmem:[#allocation5 + $0x428] sm:$0xff]
    %v230 = vld [vmem:[#allocation5 + $0x430] sm:$0xff]
    %v231 = vld [vmem:[#allocation5 + $0x438] sm:$0xff]
    %v232 = vld [vmem:[#allocation5 + $0x440] sm:$0xff]
    %v233 = vld [vmem:[#allocation5 + $0x448] sm:$0xff]
    %v234 = vld [vmem:[#allocation5 + $0x450] sm:$0xff]
    %v235 = vld [vmem:[#allocation5 + $0x458] sm:$0xff]
    %v236 = vld [vmem:[#allocation5 + $0x460] sm:$0xff]
    %v237 = vld [vmem:[#allocation5 + $0x468] sm:$0xff]
    %v238 = vld [vmem:[#allocation5 + $0x470] sm:$0xff]
    %v239 = vld [vmem:[#allocation5 + $0x478] sm:$0xff]
    %v240 = vld [vmem:[#allocation5 + $0x480] sm:$0xff]
    %v241 = vld [vmem:[#allocation5 + $0x488] sm:$0xff]
    %v242 = vld [vmem:[#allocation5 + $0x490] sm:$0xff]
    %v243 = vld [vmem:[#allocation5 + $0x498] sm:$0xff]
    %v244 = vld [vmem:[#allocation5 + $0x4a0] sm:$0xff]
    %v245 = vld [vmem:[#allocation5 + $0x4a8] sm:$0xff]
    %v246 = vld [vmem:[#allocation5 + $0x4b0] sm:$0xff]
    %v247 = vld [vmem:[#allocation5 + $0x4b8] sm:$0xff]
    %v248 = vld [vmem:[#allocation5 + $0x4c0] sm:$0xff]
    %v249 = vld [vmem:[#allocation5 + $0x4c8] sm:$0xff]
    %v250 = vld [vmem:[#allocation5 + $0x4d0] sm:$0xff]
    %v251 = vld [vmem:[#allocation5 + $0x4d8] sm:$0xff]
    %v252 = vld [vmem:[#allocation5 + $0x4e0] sm:$0xff]
    %v253 = vld [vmem:[#allocation5 + $0x4e8] sm:$0xff]
    %v254 = vld [vmem:[#allocation5 + $0x4f0] sm:$0xff]
    %v255 = vld [vmem:[#allocation5 + $0x4f8] sm:$0xff]
    %v256 = vld [vmem:[#allocation5 + $0x500] sm:$0xff]
    %v257 = vld [vmem:[#allocation5 + $0x508] sm:$0xff]
    %v258 = vld [vmem:[#allocation5 + $0x510] sm:$0xff]
    %v259 = vld [vmem:[#allocation5 + $0x518] sm:$0xff]
    %v260 = vld [vmem:[#allocation5 + $0x520] sm:$0xff]
    %v261 = vld [vmem:[#allocation5 + $0x528] sm:$0xff]
    %v262 = vld [vmem:[#allocation5 + $0x530] sm:$0xff]
    %v263 = vld [vmem:[#allocation5 + $0x538] sm:$0xff]
    %v264 = vld [vmem:[#allocation5 + $0x540] sm:$0xff]
    %v265 = vld [vmem:[#allocation5 + $0x548] sm:$0xff]
    %v266 = vld [vmem:[#allocation5 + $0x550] sm:$0xff]
    %v267 = vld [vmem:[#allocation5 + $0x558] sm:$0xff]
    %v268 = vld [vmem:[#allocation5 + $0x560] sm:$0xff]
    %v269 = vld [vmem:[#allocation5 + $0x568] sm:$0xff]
    %v270 = vld [vmem:[#allocation5 + $0x570] sm:$0xff]
    %v271 = vld [vmem:[#allocation5 + $0x578] sm:$0xff]
    %v272 = vld [vmem:[#allocation5 + $0x580] sm:$0xff]
    %v273 = vld [vmem:[#allocation5 + $0x588] sm:$0xff]
    %v274 = vld [vmem:[#allocation5 + $0x590] sm:$0xff]
    %v275 = vld [vmem:[#allocation5 + $0x598] sm:$0xff]
    %v276 = vld [vmem:[#allocation5 + $0x5a0] sm:$0xff]
    %v277 = vld [vmem:[#allocation5 + $0x5a8] sm:$0xff]
    %v278 = vld [vmem:[#allocation5 + $0x5b0] sm:$0xff]
    %v279 = vld [vmem:[#allocation5 + $0x5b8] sm:$0xff]
    %v280 = vld [vmem:[#allocation5 + $0x5c0] sm:$0xff]
    %v281 = vld [vmem:[#allocation5 + $0x5c8] sm:$0xff]
    %v282 = vld [vmem:[#allocation5 + $0x5d0] sm:$0xff]
    %v283 = vld [vmem:[#allocation5 + $0x5d8] sm:$0xff]
    %v284 = vld [vmem:[#allocation5 + $0x5e0] sm:$0xff]
    %v285 = vld [vmem:[#allocation5 + $0x5e8] sm:$0xff]
    %v286 = vld [vmem:[#allocation5 + $0x5f0] sm:$0xff]
    %v287 = vld [vmem:[#allocation5 + $0x5f8] sm:$0xff]
    %v288 = vld [vmem:[#allocation5 + $0x600] sm:$0xff]
    %v289 = vld [vmem:[#allocation5 + $0x608] sm:$0xff]
    %v290 = vld [vmem:[#allocation5 + $0x610] sm:$0xff]
    %v291 = vld [vmem:[#allocation5 + $0x618] sm:$0xff]
    %v292 = vld [vmem:[#allocation5 + $0x620] sm:$0xff]
    %v293 = vld [vmem:[#allocation5 + $0x628] sm:$0xff]
    %v294 = vld [vmem:[#allocation5 + $0x630] sm:$0xff]
    %v295 = vld [vmem:[#allocation5 + $0x638] sm:$0xff]
    %v296 = vld [vmem:[#allocation5 + $0x640] sm:$0xff]
    %v297 = vld [vmem:[#allocation5 + $0x648] sm:$0xff]
    %v298 = vld [vmem:[#allocation5 + $0x650] sm:$0xff]
    %v299 = vld [vmem:[#allocation5 + $0x658] sm:$0xff]
    %v300 = vld [vmem:[#allocation5 + $0x660] sm:$0xff]
    %v301 = vld [vmem:[#allocation5 + $0x668] sm:$0xff]
    %v302 = vld [vmem:[#allocation5 + $0x670] sm:$0xff]
    %v303 = vld [vmem:[#allocation5 + $0x678] sm:$0xff]
    %v304 = vld [vmem:[#allocation5 + $0x680] sm:$0xff]
    %v305 = vld [vmem:[#allocation5 + $0x688] sm:$0xff]
    %v306 = vld [vmem:[#allocation5 + $0x690] sm:$0xff]
    %v307 = vld [vmem:[#allocation5 + $0x698] sm:$0xff]
    %v308 = vld [vmem:[#allocation5 + $0x6a0] sm:$0xff]
    %v309 = vld [vmem:[#allocation5 + $0x6a8] sm:$0xff]
    %v310 = vld [vmem:[#allocation5 + $0x6b0] sm:$0xff]
    %v311 = vld [vmem:[#allocation5 + $0x6b8] sm:$0xff]
    %v312 = vld [vmem:[#allocation5 + $0x6c0] sm:$0xff]
    %v313 = vld [vmem:[#allocation5 + $0x6c8] sm:$0xff]
    %v314 = vld [vmem:[#allocation5 + $0x6d0] sm:$0xff]
    %v315 = vld [vmem:[#allocation5 + $0x6d8] sm:$0xff]
    %v316 = vld [vmem:[#allocation5 + $0x6e0] sm:$0xff]
    %v317 = vld [vmem:[#allocation5 + $0x6e8] sm:$0xff]
    %v318 = vld [vmem:[#allocation5 + $0x6f0] sm:$0xff]
    %v319 = vld [vmem:[#allocation5 + $0x6f8] sm:$0xff]
    %v320 = vld [vmem:[#allocation5 + $0x700] sm:$0xff]
    %v321 = vld [vmem:[#allocation5 + $0x708] sm:$0xff]
    %v322 = vld [vmem:[#allocation5 + $0x710] sm:$0xff]
    %v323 = vld [vmem:[#allocation5 + $0x718] sm:$0xff]
    %v324 = vld [vmem:[#allocation5 + $0x720] sm:$0xff]
    %v325 = vld [vmem:[#allocation5 + $0x728] sm:$0xff]
    %v326 = vld [vmem:[#allocation5 + $0x730] sm:$0xff]
    %v327 = vld [vmem:[#allocation5 + $0x738] sm:$0xff]
    %v328 = vld [vmem:[#allocation5 + $0x740] sm:$0xff]
    %v329 = vld [vmem:[#allocation5 + $0x748] sm:$0xff]
    %v330 = vld [vmem:[#allocation5 + $0x750] sm:$0xff]
    %v331 = vld [vmem:[#allocation5 + $0x758] sm:$0xff]
    %v332 = vld [vmem:[#allocation5 + $0x760] sm:$0xff]
    %v333 = vld [vmem:[#allocation5 + $0x768] sm:$0xff]
    %v334 = vld [vmem:[#allocation5 + $0x770] sm:$0xff]
    %v335 = vld [vmem:[#allocation5 + $0x778] sm:$0xff]
    %v336 = vld [vmem:[#allocation5 + $0x780] sm:$0xff]
    %v337 = vld [vmem:[#allocation5 + $0x788] sm:$0xff]
    %v338 = vld [vmem:[#allocation5 + $0x790] sm:$0xff]
    %v339 = vld [vmem:[#allocation5 + $0x798] sm:$0xff]
    %v340 = vld [vmem:[#allocation5 + $0x7a0] sm:$0xff]
    %v341 = vld [vmem:[#allocation5 + $0x7a8] sm:$0xff]
    %v342 = vld [vmem:[#allocation5 + $0x7b0] sm:$0xff]
    %v343 = vld [vmem:[#allocation5 + $0x7b8] sm:$0xff]
    %v344 = vld [vmem:[#allocation5 + $0x7c0] sm:$0xff]
    %v345 = vld [vmem:[#allocation5 + $0x7c8] sm:$0xff]
    %v346 = vld [vmem:[#allocation5 + $0x7d0] sm:$0xff]
    %v347 = vld [vmem:[#allocation5 + $0x7d8] sm:$0xff]
    %v348 = vld [vmem:[#allocation5 + $0x7e0] sm:$0xff]
    %v349 = vld [vmem:[#allocation5 + $0x7e8] sm:$0xff]
    %v350 = vld [vmem:[#allocation5 + $0x7f0] sm:$0xff]
    %v351 = vld [vmem:[#allocation5 + $0x7f8] sm:$0xff]
    %352 = vmatpush.msra.mxu0 %v126
    %353 = vmatpush.msra.mxu0 %v124
    %354 = vmatpush.msra.mxu0 %v122
    %355 = vmatpush.msra.mxu0 %v120
    %356 = vmatpush.msra.mxu0 %v118
    %357 = vmatpush.msra.mxu0 %v116
    %358 = vmatpush.msra.mxu0 %v114
    %359 = vmatpush.msra.mxu0 %v112
    %360 = vmatpush.msra.mxu0 %v110
    %361 = vmatpush.msra.mxu0 %v108
    %362 = vmatpush.msra.mxu0 %v106
    %363 = vmatpush.msra.mxu0 %v104
    %364 = vmatpush.msra.mxu0 %v102
    %365 = vmatpush.msra.mxu0 %v100
    %366 = vmatpush.msra.mxu0 %v98
    %367 = vmatpush.msra.mxu0 %v96
    %368 = vmatmul.f32.gmra.mxu0 %v88
    %v369 = vpop.f32.mrf.mxu0
    %v370 = vadd.f32 0.0, %v369
    %371 = vdwg.mxu0
    %372 = vmatpush.msra.mxu0 %v158
    %373 = vmatpush.msra.mxu0 %v156
    %374 = vmatpush.msra.mxu0 %v154
    %375 = vmatpush.msra.mxu0 %v152
    %376 = vmatpush.msra.mxu0 %v150
    %377 = vmatpush.msra.mxu0 %v148
    %378 = vmatpush.msra.mxu0 %v146
    %379 = vmatpush.msra.mxu0 %v144
    %380 = vmatpush.msra.mxu0 %v142
    %381 = vmatpush.msra.mxu0 %v140
    %382 = vmatpush.msra.mxu0 %v138
    %383 = vmatpush.msra.mxu0 %v136
    %384 = vmatpush.msra.mxu0 %v134
    %385 = vmatpush.msra.mxu0 %v132
    %386 = vmatpush.msra.mxu0 %v130
    %387 = vmatpush.msra.mxu0 %v128
    %388 = vmatmul.f32.gmra.mxu0 %v89
    %v389 = vpop.f32.mrf.mxu0
    %v390 = vadd.f32 %v370, %v389
    %391 = vdwg.mxu0
    %392 = vmatpush.msra.mxu0 %v190
    %393 = vmatpush.msra.mxu0 %v188
    %394 = vmatpush.msra.mxu0 %v186
    %395 = vmatpush.msra.mxu0 %v184
    %396 = vmatpush.msra.mxu0 %v182
    %397 = vmatpush.msra.mxu0 %v180
    %398 = vmatpush.msra.mxu0 %v178
    %399 = vmatpush.msra.mxu0 %v176
    %400 = vmatpush.msra.mxu0 %v174
    %401 = vmatpush.msra.mxu0 %v172
    %402 = vmatpush.msra.mxu0 %v170
    %403 = vmatpush.msra.mxu0 %v168
    %404 = vmatpush.msra.mxu0 %v166
    %405 = vmatpush.msra.mxu0 %v164
    %406 = vmatpush.msra.mxu0 %v162
    %407 = vmatpush.msra.mxu0 %v160
    %408 = vmatmul.f32.gmra.mxu0 %v90
    %v409 = vpop.f32.mrf.mxu0
    %v410 = vadd.f32 %v390, %v409
    %411 = vdwg.mxu0
    %412 = vmatpush.msra.mxu0 %v222
    %413 = vmatpush.msra.mxu0 %v220
    %414 = vmatpush.msra.mxu0 %v218
    %415 = vmatpush.msra.mxu0 %v216
    %416 = vmatpush.msra.mxu0 %v214
    %417 = vmatpush.msra.mxu0 %v212
    %418 = vmatpush.msra.mxu0 %v210
    %419 = vmatpush.msra.mxu0 %v208
    %420 = vmatpush.msra.mxu0 %v206
    %421 = vmatpush.msra.mxu0 %v204
    %422 = vmatpush.msra.mxu0 %v202
    %423 = vmatpush.msra.mxu0 %v200
    %424 = vmatpush.msra.mxu0 %v198
    %425 = vmatpush.msra.mxu0 %v196
    %426 = vmatpush.msra.mxu0 %v194
    %427 = vmatpush.msra.mxu0 %v192
    %428 = vmatmul.f32.gmra.mxu0 %v91
    %v429 = vpop.f32.mrf.mxu0
    %v430 = vadd.f32 %v410, %v429
    %431 = vdwg.mxu0
    %432 = vmatpush.msra.mxu0 %v254
    %433 = vmatpush.msra.mxu0 %v252
    %434 = vmatpush.msra.mxu0 %v250
    %435 = vmatpush.msra.mxu0 %v248
    %436 = vmatpush.msra.mxu0 %v246
    %437 = vmatpush.msra.mxu0 %v244
    %438 = vmatpush.msra.mxu0 %v242
    %439 = vmatpush.msra.mxu0 %v240
    %440 = vmatpush.msra.mxu0 %v238
    %441 = vmatpush.msra.mxu0 %v236
    %442 = vmatpush.msra.mxu0 %v234
    %443 = vmatpush.msra.mxu0 %v232
    %444 = vmatpush.msra.mxu0 %v230
    %445 = vmatpush.msra.mxu0 %v228
    %446 = vmatpush.msra.mxu0 %v226
    %447 = vmatpush.msra.mxu0 %v224
    %448 = vmatmul.f32.gmra.mxu0 %v92
    %v449 = vpop.f32.mrf.mxu0
    %v450 = vadd.f32 %v430, %v449
    %451 = vdwg.mxu0
    %452 = vmatpush.msra.mxu0 %v286
    %453 = vmatpush.msra.mxu0 %v284
    %454 = vmatpush.msra.mxu0 %v282
    %455 = vmatpush.msra.mxu0 %v280
    %456 = vmatpush.msra.mxu0 %v278
    %457 = vmatpush.msra.mxu0 %v276
    %458 = vmatpush.msra.mxu0 %v274
    %459 = vmatpush.msra.mxu0 %v272
    %460 = vmatpush.msra.mxu0 %v270
    %461 = vmatpush.msra.mxu0 %v268
    %462 = vmatpush.msra.mxu0 %v266
    %463 = vmatpush.msra.mxu0 %v264
    %464 = vmatpush.msra.mxu0 %v262
    %465 = vmatpush.msra.mxu0 %v260
    %466 = vmatpush.msra.mxu0 %v258
    %467 = vmatpush.msra.mxu0 %v256
    %468 = vmatmul.f32.gmra.mxu0 %v93
    %v469 = vpop.f32.mrf.mxu0
    %v470 = vadd.f32 %v450, %v469
    %471 = vdwg.mxu0
    %472 = vmatpush.msra.mxu0 %v318
    %473 = vmatpush.msra.mxu0 %v316
    %474 = vmatpush.msra.mxu0 %v314
    %475 = vmatpush.msra.mxu0 %v312
    %476 = vmatpush.msra.mxu0 %v310
    %477 = vmatpush.msra.mxu0 %v308
    %478 = vmatpush.msra.mxu0 %v306
    %479 = vmatpush.msra.mxu0 %v304
    %480 = vmatpush.msra.mxu0 %v302
    %481 = vmatpush.msra.mxu0 %v300
    %482 = vmatpush.msra.mxu0 %v298
    %483 = vmatpush.msra.mxu0 %v296
    %484 = vmatpush.msra.mxu0 %v294
    %485 = vmatpush.msra.mxu0 %v292
    %486 = vmatpush.msra.mxu0 %v290
    %487 = vmatpush.msra.mxu0 %v288
    %488 = vmatmul.f32.gmra.mxu0 %v94
    %v489 = vpop.f32.mrf.mxu0
    %v490 = vadd.f32 %v470, %v489
    %491 = vdwg.mxu0
    %492 = vmatpush.msra.mxu0 %v350
    %493 = vmatpush.msra.mxu0 %v348
    %494 = vmatpush.msra.mxu0 %v346
    %495 = vmatpush.msra.mxu0 %v344
    %496 = vmatpush.msra.mxu0 %v342
    %497 = vmatpush.msra.mxu0 %v340
    %498 = vmatpush.msra.mxu0 %v338
    %499 = vmatpush.msra.mxu0 %v336
    %500 = vmatpush.msra.mxu0 %v334
    %501 = vmatpush.msra.mxu0 %v332
    %502 = vmatpush.msra.mxu0 %v330
    %503 = vmatpush.msra.mxu0 %v328
    %504 = vmatpush.msra.mxu0 %v326
    %505 = vmatpush.msra.mxu0 %v324
    %506 = vmatpush.msra.mxu0 %v322
    %507 = vmatpush.msra.mxu0 %v320
    %508 = vmatmul.f32.gmra.mxu0 %v95
    %v509 = vpop.f32.mrf.mxu0
    %v510 = vadd.f32 %v490, %v509
    %511 = vdwg.mxu0
    %512 = vmatpush.msra.mxu0 %v127
    %513 = vmatpush.msra.mxu0 %v125
    %514 = vmatpush.msra.mxu0 %v123
    %515 = vmatpush.msra.mxu0 %v121
    %516 = vmatpush.msra.mxu0 %v119
    %517 = vmatpush.msra.mxu0 %v117
    %518 = vmatpush.msra.mxu0 %v115
    %519 = vmatpush.msra.mxu0 %v113
    %520 = vmatpush.msra.mxu0 %v111
    %521 = vmatpush.msra.mxu0 %v109
    %522 = vmatpush.msra.mxu0 %v107
    %523 = vmatpush.msra.mxu0 %v105
    %524 = vmatpush.msra.mxu0 %v103
    %525 = vmatpush.msra.mxu0 %v101
    %526 = vmatpush.msra.mxu0 %v99
    %527 = vmatpush.msra.mxu0 %v97
    %528 = vmatmul.f32.gmra.mxu0 %v88
    %v529 = vpop.f32.mrf.mxu0
    %v530 = vadd.f32 0.0, %v529
    %531 = vdwg.mxu0
    %532 = vmatpush.msra.mxu0 %v159
    %533 = vmatpush.msra.mxu0 %v157
    %534 = vmatpush.msra.mxu0 %v155
    %535 = vmatpush.msra.mxu0 %v153
    %536 = vmatpush.msra.mxu0 %v151
    %537 = vmatpush.msra.mxu0 %v149
    %538 = vmatpush.msra.mxu0 %v147
    %539 = vmatpush.msra.mxu0 %v145
    %540 = vmatpush.msra.mxu0 %v143
    %541 = vmatpush.msra.mxu0 %v141
    %542 = vmatpush.msra.mxu0 %v139
    %543 = vmatpush.msra.mxu0 %v137
    %544 = vmatpush.msra.mxu0 %v135
    %545 = vmatpush.msra.mxu0 %v133
    %546 = vmatpush.msra.mxu0 %v131
    %547 = vmatpush.msra.mxu0 %v129
    %548 = vmatmul.f32.gmra.mxu0 %v89
    %v549 = vpop.f32.mrf.mxu0
    %v550 = vadd.f32 %v530, %v549
    %551 = vdwg.mxu0
    %552 = vmatpush.msra.mxu0 %v191
    %553 = vmatpush.msra.mxu0 %v189
    %554 = vmatpush.msra.mxu0 %v187
    %555 = vmatpush.msra.mxu0 %v185
    %556 = vmatpush.msra.mxu0 %v183
    %557 = vmatpush.msra.mxu0 %v181
    %558 = vmatpush.msra.mxu0 %v179
    %559 = vmatpush.msra.mxu0 %v177
    %560 = vmatpush.msra.mxu0 %v175
    %561 = vmatpush.msra.mxu0 %v173
    %562 = vmatpush.msra.mxu0 %v171
    %563 = vmatpush.msra.mxu0 %v169
    %564 = vmatpush.msra.mxu0 %v167
    %565 = vmatpush.msra.mxu0 %v165
    %566 = vmatpush.msra.mxu0 %v163
    %567 = vmatpush.msra.mxu0 %v161
    %568 = vmatmul.f32.gmra.mxu0 %v90
    %v569 = vpop.f32.mrf.mxu0
    %v570 = vadd.f32 %v550, %v569
    %571 = vdwg.mxu0
    %572 = vmatpush.msra.mxu0 %v223
    %573 = vmatpush.msra.mxu0 %v221
    %574 = vmatpush.msra.mxu0 %v219
    %575 = vmatpush.msra.mxu0 %v217
    %576 = vmatpush.msra.mxu0 %v215
    %577 = vmatpush.msra.mxu0 %v213
    %578 = vmatpush.msra.mxu0 %v211
    %579 = vmatpush.msra.mxu0 %v209
    %580 = vmatpush.msra.mxu0 %v207
    %581 = vmatpush.msra.mxu0 %v205
    %582 = vmatpush.msra.mxu0 %v203
    %583 = vmatpush.msra.mxu0 %v201
    %584 = vmatpush.msra.mxu0 %v199
    %585 = vmatpush.msra.mxu0 %v197
    %586 = vmatpush.msra.mxu0 %v195
    %587 = vmatpush.msra.mxu0 %v193
    %588 = vmatmul.f32.gmra.mxu0 %v91
    %v589 = vpop.f32.mrf.mxu0
    %v590 = vadd.f32 %v570, %v589
    %591 = vdwg.mxu0
    %592 = vmatpush.msra.mxu0 %v255
    %593 = vmatpush.msra.mxu0 %v253
    %594 = vmatpush.msra.mxu0 %v251
    %595 = vmatpush.msra.mxu0 %v249
    %596 = vmatpush.msra.mxu0 %v247
    %597 = vmatpush.msra.mxu0 %v245
    %598 = vmatpush.msra.mxu0 %v243
    %599 = vmatpush.msra.mxu0 %v241
    %600 = vmatpush.msra.mxu0 %v239
    %601 = vmatpush.msra.mxu0 %v237
    %602 = vmatpush.msra.mxu0 %v235
    %603 = vmatpush.msra.mxu0 %v233
    %604 = vmatpush.msra.mxu0 %v231
    %605 = vmatpush.msra.mxu0 %v229
    %606 = vmatpush.msra.mxu0 %v227
    %607 = vmatpush.msra.mxu0 %v225
    %608 = vmatmul.f32.gmra.mxu0 %v92
    %v609 = vpop.f32.mrf.mxu0
    %v610 = vadd.f32 %v590, %v609
    %611 = vdwg.mxu0
    %612 = vmatpush.msra.mxu0 %v287
    %613 = vmatpush.msra.mxu0 %v285
    %614 = vmatpush.msra.mxu0 %v283
    %615 = vmatpush.msra.mxu0 %v281
    %616 = vmatpush.msra.mxu0 %v279
    %617 = vmatpush.msra.mxu0 %v277
    %618 = vmatpush.msra.mxu0 %v275
    %619 = vmatpush.msra.mxu0 %v273
    %620 = vmatpush.msra.mxu0 %v271
    %621 = vmatpush.msra.mxu0 %v269
    %622 = vmatpush.msra.mxu0 %v267
    %623 = vmatpush.msra.mxu0 %v265
    %624 = vmatpush.msra.mxu0 %v263
    %625 = vmatpush.msra.mxu0 %v261
    %626 = vmatpush.msra.mxu0 %v259
    %627 = vmatpush.msra.mxu0 %v257
    %628 = vmatmul.f32.gmra.mxu0 %v93
    %v629 = vpop.f32.mrf.mxu0
    %v630 = vadd.f32 %v610, %v629
    %631 = vdwg.mxu0
    %632 = vmatpush.msra.mxu0 %v319
    %633 = vmatpush.msra.mxu0 %v317
    %634 = vmatpush.msra.mxu0 %v315
    %635 = vmatpush.msra.mxu0 %v313
    %636 = vmatpush.msra.mxu0 %v311
    %637 = vmatpush.msra.mxu0 %v309
    %638 = vmatpush.msra.mxu0 %v307
    %639 = vmatpush.msra.mxu0 %v305
    %640 = vmatpush.msra.mxu0 %v303
    %641 = vmatpush.msra.mxu0 %v301
    %642 = vmatpush.msra.mxu0 %v299
    %643 = vmatpush.msra.mxu0 %v297
    %644 = vmatpush.msra.mxu0 %v295
    %645 = vmatpush.msra.mxu0 %v293
    %646 = vmatpush.msra.mxu0 %v291
    %647 = vmatpush.msra.mxu0 %v289
    %648 = vmatmul.f32.gmra.mxu0 %v94
    %v649 = vpop.f32.mrf.mxu0
    %v650 = vadd.f32 %v630, %v649
    %651 = vdwg.mxu0
    %652 = vmatpush.msra.mxu0 %v351
    %653 = vmatpush.msra.mxu0 %v349
    %654 = vmatpush.msra.mxu0 %v347
    %655 = vmatpush.msra.mxu0 %v345
    %656 = vmatpush.msra.mxu0 %v343
    %657 = vmatpush.msra.mxu0 %v341
    %658 = vmatpush.msra.mxu0 %v339
    %659 = vmatpush.msra.mxu0 %v337
    %660 = vmatpush.msra.mxu0 %v335
    %661 = vmatpush.msra.mxu0 %v333
    %662 = vmatpush.msra.mxu0 %v331
    %663 = vmatpush.msra.mxu0 %v329
    %664 = vmatpush.msra.mxu0 %v327
    %665 = vmatpush.msra.mxu0 %v325
    %666 = vmatpush.msra.mxu0 %v323
    %667 = vmatpush.msra.mxu0 %v321
    %668 = vmatmul.f32.gmra.mxu0 %v95
    %v669 = vpop.f32.mrf.mxu0
    %v670 = vadd.f32 %v650, %v669
    %671 = vdwg.mxu0
    %v672 = vld [vmem:[#allocation7] sm:$0xff]
    %v673 = vld [vmem:[#allocation7 + $0x8] sm:$0xff]
    %v674 = vld [vmem:[#allocation7 + $0x10] sm:$0xff]
    %v675 = vld [vmem:[#allocation7 + $0x18] sm:$0xff]
    %v676 = vld [vmem:[#allocation7 + $0x20] sm:$0xff]
    %v677 = vld [vmem:[#allocation7 + $0x28] sm:$0xff]
    %v678 = vld [vmem:[#allocation7 + $0x30] sm:$0xff]
    %v679 = vld [vmem:[#allocation7 + $0x38] sm:$0xff]
    %v680 = vld [vmem:[#allocation7 + $0x40] sm:$0xff]
    %v681 = vld [vmem:[#allocation7 + $0x48] sm:$0xff]
    %v682 = vld [vmem:[#allocation7 + $0x50] sm:$0xff]
    %v683 = vld [vmem:[#allocation7 + $0x58] sm:$0xff]
    %v684 = vld [vmem:[#allocation7 + $0x60] sm:$0xff]
    %v685 = vld [vmem:[#allocation7 + $0x68] sm:$0xff]
    %v686 = vld [vmem:[#allocation7 + $0x70] sm:$0xff]
    %v687 = vld [vmem:[#allocation7 + $0x78] sm:$0xff]
    %v688 = vld [vmem:[#allocation7 + $0x80] sm:$0xff]
    %v689 = vld [vmem:[#allocation7 + $0x88] sm:$0xff]
    %v690 = vld [vmem:[#allocation7 + $0x90] sm:$0xff]
    %v691 = vld [vmem:[#allocation7 + $0x98] sm:$0xff]
    %v692 = vld [vmem:[#allocation7 + $0xa0] sm:$0xff]
    %v693 = vld [vmem:[#allocation7 + $0xa8] sm:$0xff]
    %v694 = vld [vmem:[#allocation7 + $0xb0] sm:$0xff]
    %v695 = vld [vmem:[#allocation7 + $0xb8] sm:$0xff]
    %v696 = vld [vmem:[#allocation7 + $0xc0] sm:$0xff]
    %v697 = vld [vmem:[#allocation7 + $0xc8] sm:$0xff]
    %v698 = vld [vmem:[#allocation7 + $0xd0] sm:$0xff]
    %v699 = vld [vmem:[#allocation7 + $0xd8] sm:$0xff]
    %v700 = vld [vmem:[#allocation7 + $0xe0] sm:$0xff]
    %v701 = vld [vmem:[#allocation7 + $0xe8] sm:$0xff]
    %v702 = vld [vmem:[#allocation7 + $0xf0] sm:$0xff]
    %v703 = vld [vmem:[#allocation7 + $0xf8] sm:$0xff]
    %s704 = scalar_lea.vmem [#allocation7], 256
    %v705 = vld [vmem:[%s704] sm:$0xff]
    %v706 = vld [vmem:[%s704 + $0x8] sm:$0xff]
    %v707 = vld [vmem:[%s704 + $0x10] sm:$0xff]
    %v708 = vld [vmem:[%s704 + $0x18] sm:$0xff]
    %v709 = vld [vmem:[%s704 + $0x20] sm:$0xff]
    %v710 = vld [vmem:[%s704 + $0x28] sm:$0xff]
    %v711 = vld [vmem:[%s704 + $0x30] sm:$0xff]
    %v712 = vld [vmem:[%s704 + $0x38] sm:$0xff]
    %v713 = vld [vmem:[%s704 + $0x40] sm:$0xff]
    %v714 = vld [vmem:[%s704 + $0x48] sm:$0xff]
    %v715 = vld [vmem:[%s704 + $0x50] sm:$0xff]
    %v716 = vld [vmem:[%s704 + $0x58] sm:$0xff]
    %v717 = vld [vmem:[%s704 + $0x60] sm:$0xff]
    %v718 = vld [vmem:[%s704 + $0x68] sm:$0xff]
    %v719 = vld [vmem:[%s704 + $0x70] sm:$0xff]
    %v720 = vld [vmem:[%s704 + $0x78] sm:$0xff]
    %v721 = vld [vmem:[%s704 + $0x80] sm:$0xff]
    %v722 = vld [vmem:[%s704 + $0x88] sm:$0xff]
    %v723 = vld [vmem:[%s704 + $0x90] sm:$0xff]
    %v724 = vld [vmem:[%s704 + $0x98] sm:$0xff]
    %v725 = vld [vmem:[%s704 + $0xa0] sm:$0xff]
    %v726 = vld [vmem:[%s704 + $0xa8] sm:$0xff]
    %v727 = vld [vmem:[%s704 + $0xb0] sm:$0xff]
    %v728 = vld [vmem:[%s704 + $0xb8] sm:$0xff]
    %v729 = vld [vmem:[%s704 + $0xc0] sm:$0xff]
    %v730 = vld [vmem:[%s704 + $0xc8] sm:$0xff]
    %v731 = vld [vmem:[%s704 + $0xd0] sm:$0xff]
    %v732 = vld [vmem:[%s704 + $0xd8] sm:$0xff]
    %v733 = vld [vmem:[%s704 + $0xe0] sm:$0xff]
    %v734 = vld [vmem:[%s704 + $0xe8] sm:$0xff]
    %v735 = vld [vmem:[%s704 + $0xf0] sm:$0xff]
    %v736 = vld [vmem:[%s704 + $0xf8] sm:$0xff]
    %v739 = vrot.slane %v510, 2
    %v740 = vrot.slane %v670, 2
    %743 = vmatpush.msra.mxu0 %v720
    %744 = vmatpush.msra.mxu0 %v719
    %745 = vmatpush.msra.mxu0 %v718
    %746 = vmatpush.msra.mxu0 %v717
    %747 = vmatpush.msra.mxu0 %v716
    %748 = vmatpush.msra.mxu0 %v715
    %749 = vmatpush.msra.mxu0 %v714
    %750 = vmatpush.msra.mxu0 %v713
    %751 = vmatpush.msra.mxu0 %v712
    %752 = vmatpush.msra.mxu0 %v711
    %753 = vmatpush.msra.mxu0 %v710
    %754 = vmatpush.msra.mxu0 %v709
    %755 = vmatpush.msra.mxu0 %v708
    %756 = vmatpush.msra.mxu0 %v707
    %757 = vmatpush.msra.mxu0 %v706
    %758 = vmatpush.msra.mxu0 %v705
    %759 = vmatmul.f32.gmra.mxu0 %v739
    %v760 = vpop.f32.mrf.mxu0
    %v761 = vadd.f32 0.0, %v760
    %762 = vdwg.mxu0
    %763 = vmatpush.msra.mxu0 %v736
    %764 = vmatpush.msra.mxu0 %v735
    %765 = vmatpush.msra.mxu0 %v734
    %766 = vmatpush.msra.mxu0 %v733
    %767 = vmatpush.msra.mxu0 %v732
    %768 = vmatpush.msra.mxu0 %v731
    %769 = vmatpush.msra.mxu0 %v730
    %770 = vmatpush.msra.mxu0 %v729
    %771 = vmatpush.msra.mxu0 %v728
    %772 = vmatpush.msra.mxu0 %v727
    %773 = vmatpush.msra.mxu0 %v726
    %774 = vmatpush.msra.mxu0 %v725
    %775 = vmatpush.msra.mxu0 %v724
    %776 = vmatpush.msra.mxu0 %v723
    %777 = vmatpush.msra.mxu0 %v722
    %778 = vmatpush.msra.mxu0 %v721
    %779 = vmatmul.f32.gmra.mxu0 %v740
    %v780 = vpop.f32.mrf.mxu0
    %v781 = vadd.f32 %v761, %v780
    %782 = vdwg.mxu0
    %783 = vmatpush.msra.mxu0 %v687
    %784 = vmatpush.msra.mxu0 %v686
    %785 = vmatpush.msra.mxu0 %v685
    %786 = vmatpush.msra.mxu0 %v684
    %787 = vmatpush.msra.mxu0 %v683
    %788 = vmatpush.msra.mxu0 %v682
    %789 = vmatpush.msra.mxu0 %v681
    %790 = vmatpush.msra.mxu0 %v680
    %791 = vmatpush.msra.mxu0 %v679
    %792 = vmatpush.msra.mxu0 %v678
    %793 = vmatpush.msra.mxu0 %v677
    %794 = vmatpush.msra.mxu0 %v676
    %795 = vmatpush.msra.mxu0 %v675
    %796 = vmatpush.msra.mxu0 %v674
    %797 = vmatpush.msra.mxu0 %v673
    %798 = vmatpush.msra.mxu0 %v672
    %799 = vmatmul.f32.gmra.mxu0 %v510
    %v800 = vpop.f32.mrf.mxu0
    %v801 = vadd.f32 %v781, %v800
    %802 = vdwg.mxu0
    %803 = vmatpush.msra.mxu0 %v703
    %804 = vmatpush.msra.mxu0 %v702
    %805 = vmatpush.msra.mxu0 %v701
    %806 = vmatpush.msra.mxu0 %v700
    %807 = vmatpush.msra.mxu0 %v699
    %808 = vmatpush.msra.mxu0 %v698
    %809 = vmatpush.msra.mxu0 %v697
    %810 = vmatpush.msra.mxu0 %v696
    %811 = vmatpush.msra.mxu0 %v695
    %812 = vmatpush.msra.mxu0 %v694
    %813 = vmatpush.msra.mxu0 %v693
    %814 = vmatpush.msra.mxu0 %v692
    %815 = vmatpush.msra.mxu0 %v691
    %816 = vmatpush.msra.mxu0 %v690
    %817 = vmatpush.msra.mxu0 %v689
    %818 = vmatpush.msra.mxu0 %v688
    %819 = vmatmul.f32.gmra.mxu0 %v670
    %v820 = vpop.f32.mrf.mxu0
    %v821 = vadd.f32 %v801, %v820
    %822 = vdwg.mxu0
    %s823 = scalar_lea.vmem [#allocation7], 512
    %v824 = vld [vmem:[%s823] sm:$0xff]
    %v825 = vld [vmem:[%s823 + $0x8] sm:$0xff]
    %v826 = vld [vmem:[%s823 + $0x10] sm:$0xff]
    %v827 = vld [vmem:[%s823 + $0x18] sm:$0xff]
    %v828 = vld [vmem:[%s823 + $0x20] sm:$0xff]
    %v829 = vld [vmem:[%s823 + $0x28] sm:$0xff]
    %v830 = vld [vmem:[%s823 + $0x30] sm:$0xff]
    %v831 = vld [vmem:[%s823 + $0x38] sm:$0xff]
    %v832 = vld [vmem:[%s823 + $0x40] sm:$0xff]
    %v833 = vld [vmem:[%s823 + $0x48] sm:$0xff]
    %v834 = vld [vmem:[%s823 + $0x50] sm:$0xff]
    %v835 = vld [vmem:[%s823 + $0x58] sm:$0xff]
    %v836 = vld [vmem:[%s823 + $0x60] sm:$0xff]
    %v837 = vld [vmem:[%s823 + $0x68] sm:$0xff]
    %v838 = vld [vmem:[%s823 + $0x70] sm:$0xff]
    %v839 = vld [vmem:[%s823 + $0x78] sm:$0xff]
    %v840 = vld [vmem:[%s823 + $0x80] sm:$0xff]
    %v841 = vld [vmem:[%s823 + $0x88] sm:$0xff]
    %v842 = vld [vmem:[%s823 + $0x90] sm:$0xff]
    %v843 = vld [vmem:[%s823 + $0x98] sm:$0xff]
    %v844 = vld [vmem:[%s823 + $0xa0] sm:$0xff]
    %v845 = vld [vmem:[%s823 + $0xa8] sm:$0xff]
    %v846 = vld [vmem:[%s823 + $0xb0] sm:$0xff]
    %v847 = vld [vmem:[%s823 + $0xb8] sm:$0xff]
    %v848 = vld [vmem:[%s823 + $0xc0] sm:$0xff]
    %v849 = vld [vmem:[%s823 + $0xc8] sm:$0xff]
    %v850 = vld [vmem:[%s823 + $0xd0] sm:$0xff]
    %v851 = vld [vmem:[%s823 + $0xd8] sm:$0xff]
    %v852 = vld [vmem:[%s823 + $0xe0] sm:$0xff]
    %v853 = vld [vmem:[%s823 + $0xe8] sm:$0xff]
    %v854 = vld [vmem:[%s823 + $0xf0] sm:$0xff]
    %v855 = vld [vmem:[%s823 + $0xf8] sm:$0xff]
    %v856 = vrot.slane %v510, 4
    %v857 = vrot.slane %v670, 4
    %860 = vmatpush.msra.mxu0 %v839
    %861 = vmatpush.msra.mxu0 %v838
    %862 = vmatpush.msra.mxu0 %v837
    %863 = vmatpush.msra.mxu0 %v836
    %864 = vmatpush.msra.mxu0 %v835
    %865 = vmatpush.msra.mxu0 %v834
    %866 = vmatpush.msra.mxu0 %v833
    %867 = vmatpush.msra.mxu0 %v832
    %868 = vmatpush.msra.mxu0 %v831
    %869 = vmatpush.msra.mxu0 %v830
    %870 = vmatpush.msra.mxu0 %v829
    %871 = vmatpush.msra.mxu0 %v828
    %872 = vmatpush.msra.mxu0 %v827
    %873 = vmatpush.msra.mxu0 %v826
    %874 = vmatpush.msra.mxu0 %v825
    %875 = vmatpush.msra.mxu0 %v824
    %876 = vmatmul.f32.gmra.mxu0 %v856
    %v877 = vpop.f32.mrf.mxu0
    %v878 = vadd.f32 0.0, %v877
    %879 = vdwg.mxu0
    %880 = vmatpush.msra.mxu0 %v855
    %881 = vmatpush.msra.mxu0 %v854
    %882 = vmatpush.msra.mxu0 %v853
    %883 = vmatpush.msra.mxu0 %v852
    %884 = vmatpush.msra.mxu0 %v851
    %885 = vmatpush.msra.mxu0 %v850
    %886 = vmatpush.msra.mxu0 %v849
    %887 = vmatpush.msra.mxu0 %v848
    %888 = vmatpush.msra.mxu0 %v847
    %889 = vmatpush.msra.mxu0 %v846
    %890 = vmatpush.msra.mxu0 %v845
    %891 = vmatpush.msra.mxu0 %v844
    %892 = vmatpush.msra.mxu0 %v843
    %893 = vmatpush.msra.mxu0 %v842
    %894 = vmatpush.msra.mxu0 %v841
    %895 = vmatpush.msra.mxu0 %v840
    %896 = vmatmul.f32.gmra.mxu0 %v857
    %v897 = vpop.f32.mrf.mxu0
    %v898 = vadd.f32 %v878, %v897
    %899 = vdwg.mxu0
    %v900 = vadd.f32 %v821, %v898
    %v901 = vld [vmem:[%s3] sm:$0x1]
    %v903 = vperm.slane %v901, 0
    %v905 = vadd.f32 %v900, %v903
    %v906 = vmax.f32 %v905, 0.0
    %v907 = vld [vmem:[#allocation8] sm:$0xff]
    %v908 = vld [vmem:[#allocation8 + $0x8] sm:$0xff]
    %v909 = vld [vmem:[#allocation8 + $0x10] sm:$0xff]
    %v910 = vld [vmem:[#allocation8 + $0x18] sm:$0xff]
    %v911 = vld [vmem:[#allocation8 + $0x20] sm:$0xff]
    %v912 = vld [vmem:[#allocation8 + $0x28] sm:$0xff]
    %v913 = vld [vmem:[#allocation8 + $0x30] sm:$0xff]
    %v914 = vld [vmem:[#allocation8 + $0x38] sm:$0xff]
    %v915 = vld [vmem:[#allocation8 + $0x40] sm:$0xff]
    %v916 = vld [vmem:[#allocation8 + $0x48] sm:$0xff]
    %v917 = vld [vmem:[#allocation8 + $0x50] sm:$0xff]
    %v918 = vld [vmem:[#allocation8 + $0x58] sm:$0xff]
    %v919 = vld [vmem:[#allocation8 + $0x60] sm:$0xff]
    %v920 = vld [vmem:[#allocation8 + $0x68] sm:$0xff]
    %v921 = vld [vmem:[#allocation8 + $0x70] sm:$0xff]
    %v922 = vld [vmem:[#allocation8 + $0x78] sm:$0xff]
    %v923 = vld [vmem:[%s5] sm:$0x1]
    %v925 = vperm.slane %v923, 0
    %927 = vmatpush.msra.mxu0 %v922
    %928 = vmatpush.msra.mxu0 %v921
    %929 = vmatpush.msra.mxu0 %v920
    %930 = vmatpush.msra.mxu0 %v919
    %931 = vmatpush.msra.mxu0 %v918
    %932 = vmatpush.msra.mxu0 %v917
    %933 = vmatpush.msra.mxu0 %v916
    %934 = vmatpush.msra.mxu0 %v915
    %935 = vmatpush.msra.mxu0 %v914
    %936 = vmatpush.msra.mxu0 %v913
    %937 = vmatpush.msra.mxu0 %v912
    %938 = vmatpush.msra.mxu0 %v911
    %939 = vmatpush.msra.mxu0 %v910
    %940 = vmatpush.msra.mxu0 %v909
    %941 = vmatpush.msra.mxu0 %v908
    %942 = vmatpush.msra.mxu0 %v907
    %943 = vmatmul.f32.gmra.mxu0 %v906
    %v944 = vpop.f32.mrf.mxu0
    %v945 = vadd.f32 %v925, %v944
    %946 = vdwg.mxu0
    %v947 = vld [vmem:[%s6] sm:$0x1]
    %v949 = vperm.slane %v947, 0
    %v951 = vadd.f32 %v945, %v949
    %952 = vst [vmem:[#allocation10] sm:$0x3] %v951
    // Predicated region
    $region46: #{tpu_custom_call.1} parent=1 // pred_check
      _
    $region47: #{tpu_custom_call.1} parent=1 // pred_check_branch
      %954 = sbr.rel (0) target = $region49
    $region48: #{tpu_custom_call.1} parent=1 // pred_region
      %956 = vsyncadd [#allocation4], 0
      %s958 = sshll.u32 [#allocation10], 4
      %s959 = int_to_ptr.vmem [resolvable:$true] %s958
      %s960 = sshll.u32 %s7, 4
      %s961 = int_to_ptr.hbm [resolvable:$true] %s960
      %963 = dma.vmem_to_hbm [thread:$0]  %s959, 32, %s961, [#allocation4]
    $region49: #{tpu_custom_call.1} parent=1 // pred_fallthru
      _
    // Predicated region
    $region50: #{tpu_custom_call.1} parent=1 // pred_check
      _
    $region51: #{tpu_custom_call.1} parent=1 // pred_check_branch
      %965 = sbr.rel (0) target = $region53
    $region52: #{tpu_custom_call.1} parent=1 // pred_region
      %967 = dma.done [#allocation4], 32
    $region53: #{tpu_custom_call.1} parent=1 // pred_fallthru
      _
    %968 = vsyncpa [#allocation3], 1
    %969 = vsyncpa [#allocation6], 1
    %970 = vsyncpa [#allocation9], 1
    %971 = vsyncpa [#allocation4], 1

</llo_original>
